<compile_context>
chip_gen: v5e
topology: v5e:2x2
jax: 0.10.0
libtpu: 0.0.40
codegen_flags: <defaults>
</compile_context>

<pallas_src>
import jax
import jax.numpy as jnp
from jax.experimental import pallas as pl
from jax.experimental.pallas import tpu as pltpu


def _patch_embed_kernel(x_ref, o_ref):
    # x_ref: (tC, tHW) channels-major tile ; o_ref: (tHW, tC) tokens-major tile
    # Plain 2D tile transpose (lowers to XLU vxpose on (8,128)-aligned vregs).
    o_ref[...] = x_ref[...].T


def _pick_tiles(C, HW, itemsize):
    """Byte-budgeted, lane-aligned tile sizes.

    Each tile axis must be a multiple of 128 or the full axis (it sits on the
    lane dim on one side of the transpose and on the sublane dim on the
    other). tC is grown toward full C first (output last-dim contiguity /
    unmasked stores), then tHW fills the remaining per-tile byte budget.
    """
    TILE_BYTES = 2 * 1024 * 1024   # per-tile cap; x4 buffers = 8 MiB VMEM,
                                   # inside v5e's 16 MiB default scoped limit
    MAX_AXIS = 2048                # element cap per axis (a 128-multiple)

    tC = C if C <= MAX_AXIS else MAX_AXIS
    hw_budget = max(128, TILE_BYTES // (tC * itemsize))
    if HW <= hw_budget:
        tHW = HW                   # full-axis block is always legal
    else:
        tHW = min(MAX_AXIS, (hw_budget // 128) * 128)
    return tC, tHW


def patch_embed(x):
    """x: (B, C, H, W) -> (B, H*W, C), matching PatchEmbed.forward."""
    B, C, H, W = x.shape
    HW = H * W
    x_flat = x.reshape(B, C, HW)   # free reshape, no data-dependent compute

    # Guard the tiny-axis path: with C (or HW) below one lane width the stores
    # would be masked partials; let XLA handle the degenerate case instead.
    if C < 128 or HW < 128:
        return jnp.transpose(x_flat, (0, 2, 1))

    itemsize = jnp.dtype(x.dtype).itemsize
    tC, tHW = _pick_tiles(C, HW, itemsize)

    out = pl.pallas_call(
        _patch_embed_kernel,
        out_shape=jax.ShapeDtypeStruct((B, HW, C), x.dtype),
        grid_spec=pltpu.PrefetchScalarGridSpec(
            num_scalar_prefetch=0,
            grid=(B, pl.cdiv(HW, tHW), pl.cdiv(C, tC)),
            in_specs=[
                # input (B, C, HW): block [b, j*tC:, i*tHW:]
                pl.BlockSpec(
                    (pl.Squeezed(), tC, tHW),
                    lambda b, i, j: (b, j, i),
                ),
            ],
            # output (B, HW, C): block [b, i*tHW:, j*tC:]
            out_specs=pl.BlockSpec(
                (pl.Squeezed(), tHW, tC),
                lambda b, i, j: (b, i, j),
            ),
        ),
        compiler_params=pltpu.CompilerParams(
            # No reduction anywhere: every grid point writes a distinct output
            # block, so all axes may shard across TensorCores (matters on v7x
            # when B * n_hw is small or odd).
            dimension_semantics=("parallel", "parallel", "parallel"),
        ),
        cost_estimate=pl.CostEstimate(
            flops=0,
            transcendentals=0,
            bytes_accessed=2 * B * HW * C * itemsize,
        ),
    )(x_flat)
    return out


if __name__ == "__main__":
    key = jax.random.PRNGKey(0)

    # Pallas path: C and HW both >= 128 -> lane-dense, unmasked stores.
    B, C, H, W = 2, 128, 16, 16
    x = jax.random.normal(key, (B, C, H, W), dtype=jnp.float32)
    y = jax.block_until_ready(patch_embed(x))
    y_ref = jnp.transpose(x.reshape(B, C, H * W), (0, 2, 1))
    assert y.shape == (B, H * W, C), y.shape
    assert jnp.allclose(y, y_ref), "mismatch vs reference (pallas path)"

    # Small-C guard path (C < 128 falls back to XLA's transpose by design).
    xs = jax.random.normal(key, (2, 4, 16, 16), dtype=jnp.float32)
    ys = jax.block_until_ready(patch_embed(xs))
    ys_ref = jnp.transpose(xs.reshape(2, 4, 16 * 16), (0, 2, 1))
    assert ys.shape == (2, 16 * 16, 4), ys.shape
    assert jnp.allclose(ys, ys_ref), "mismatch vs reference (fallback path)"

    print("KERNEL_OK")
</pallas_src>

<mosaic_0001>
module attributes {stable_mosaic.version = 11 : i64} {
  func.func @_patch_embed_kernel(%arg0: i32, %arg1: i32, %arg2: i32, %arg3: memref<1x128x256xf32, #tpu.memory_space<vmem>>, %arg4: memref<1x256x128xf32, #tpu.memory_space<vmem>>) attributes {dimension_semantics = [#tpu.dimension_semantics<parallel>, #tpu.dimension_semantics<parallel>, #tpu.dimension_semantics<parallel>], iteration_bounds = array<i64: 2, 1, 1>, scalar_prefetch = 0 : i64, scratch_operands = 0 : i64, tpu.core_type = #tpu.core_type<tc>, window_params = [{transform_indices = @transform_0, window_bounds = array<i64: 1, 128, 256>}, {transform_indices = @transform_1, window_bounds = array<i64: 1, 256, 128>}]} {
    %c0 = arith.constant 0 : index
    %c0_0 = arith.constant 0 : index
    %c0_1 = arith.constant 0 : index
    %0 = vector.load %arg3[%c0, %c0_0, %c0_1] : memref<1x128x256xf32, #tpu.memory_space<vmem>>, vector<1x128x256xf32>
    %1 = vector.shape_cast %0 : vector<1x128x256xf32> to vector<128x256xf32>
    %2 = tpu.transpose %1, [1, 0] : vector<128x256xf32> -> vector<256x128xf32>
    %c0_2 = arith.constant 0 : index
    %c0_3 = arith.constant 0 : index
    %c0_4 = arith.constant 0 : index
    %3 = vector.load %arg4[%c0_2, %c0_3, %c0_4] : memref<1x256x128xf32, #tpu.memory_space<vmem>>, vector<1x256x128xf32>
    %4 = vector.shape_cast %3 : vector<1x256x128xf32> to vector<256x128xf32>
    %5 = vector.shape_cast %2 : vector<256x128xf32> to vector<1x256x128xf32>
    tpu.vector_store %arg4[%c0_2, %c0_3, %c0_4], %5 {strides = array<i32>} : memref<1x256x128xf32, #tpu.memory_space<vmem>>, vector<1x256x128xf32>,
    return
  }
  func.func @transform_0(%arg0: i32, %arg1: i32, %arg2: i32) -> (i32, i32, i32) {
    %c0_i32 = arith.constant 0 : i32
    return %arg0, %arg2, %arg1 : i32, i32, i32
  }
  func.func @transform_1(%arg0: i32, %arg1: i32, %arg2: i32) -> (i32, i32, i32) {
    %c0_i32 = arith.constant 0 : i32
    return %arg0, %arg1, %arg2 : i32, i32, i32
  }
}

</mosaic_0001>

<llo_original>
// kernel: tpu_custom_call.1
$region0: #{tpu_custom_call.1}
  #allocation0 [shape = 'u32[]', space=smem, size = 0x4, offset = 0x4, fixed_abs, tag = 'smem constant byte address 0x4 - core index']
  #allocation1 [shape = 'u32[72,128]{1,0:T(1,128)}', space=vmem, size = 0x9000, scoped, tag = 'internal scratch']
  %s0 = inlined_call_operand.hbm [shape: f32[2,128,256], index: 0, kind: input, shape index: {}]
  %s1 = inlined_call_operand.hbm [shape: f32[2,256,128], index: 1, kind: output, shape index: {}]
  %s2 = sld [smem:[#allocation0]]
  $region41: #{tpu_custom_call.1} parent=0
    _
  %s4 = ssub.s32 1, %s2
  %s5 = scalar_select 0, %s4, %s2
  $region1: #{tpu_custom_call.1} parent=0
    #allocation2 [shape = 'u8[262144]{0}', space=vmem, size = 0x40000, scoped, tag = 'input window, operand 0']
    #allocation3 [shape = 's32[2]{0}', space=sflag, size = 0x8, scoped, tag = 'scoped memory for tpu_custom_call.1']
    #allocation4 [shape = 's32[2]{0}', space=sflag, size = 0x8, scoped, tag = 'scoped memory for tpu_custom_call.1']
    #allocation5 [shape = 'u8[262144]{0}', space=vmem, size = 0x40000, scoped, tag = 'output window, operand 0']
    %6 = vsyncpa [#allocation3], 0
    %s7 = scalar_lea.sflag [#allocation3], 1
    %8 = vsyncpa %s7, 0
    %9 = vsyncpa [#allocation4], 0
    %s10 = scalar_lea.sflag [#allocation4], 1
    %11 = vsyncpa %s10, 0
    loop: start=0, step=1, limit=4
    $region2: #{tpu_custom_call.1} parent=1 // loop_pre_header
      _
    $region3: #{tpu_custom_call.1} parent=1 // loop_header
      %s13 = sphi 0, %s17
      %p14 = scmp.ge.s32.totalorder %s13, 4
      %s20 = sphi 0, %s39
      %s21 = sphi 0, %s35
      %s22 = sphi 0, %s31
      %s23 = sphi 0, %s20
      %s24 = sphi 0, %s21
      %s25 = sphi 0, %s22
      %s26 = sphi 0, %s23
      %s27 = sphi 0, %s24
      %s28 = sphi 0, %s25
      %s46 = sphi 0, %s48
      %s49 = sphi 0, %s46
      %s50 = sphi 0, %s49
      %s66 = sphi 0, %s50
      %s76 = sphi 0, %s78
      %s79 = sphi 0, %s76
      %s80 = sphi 0, %s79
      %s96 = sphi 0, %s80
    $region4: #{tpu_custom_call.1} parent=1 // loop_header_branch
      %16 = sbr.rel (%p14) target = $region8
    $region5: #{tpu_custom_call.1} parent=1 // loop_body
      %s18 = ssub.s32 %s13, 1
      %s19 = ssub.s32 %s13, 2
      %s29 = sadd.s32 1, %s22
      %p30 = scmp.ge.s32.totalorder %s29, 1
      %s31 = scalar_select %p30, 0, %s29
      %s32 = sadd.s32 1, %s21
      %s33 = scalar_select %p30, %s32, %s21
      %p34 = scmp.ge.s32.totalorder %s33, 1
      %s35 = scalar_select %p34, 0, %s33
      %s36 = sadd.s32 1, %s20
      %s37 = scalar_select %p34, %s36, %s20
      %p38 = scmp.ge.s32.totalorder %s37, 2
      %s39 = scalar_select %p38, 0, %s37
      %s40 = ssub.s32 %s20, %s39
      %s41 = ssub.s32 %s22, %s31
      %s42 = sor.u32 %s40, %s41
      %s43 = ssub.s32 %s21, %s35
      %s44 = sor.u32 %s42, %s43
      %p45 = scmp.eq.s32.totalorder %s44, 0
      %s47 = sadd.s32 %s46, 1
      %s48 = scalar_select %p45, %s46, %s47
      %p51 = pneg %p45
      %p52 = scmp.eq.s32.totalorder %s13, 1
      %p53 = por %p51, %p52
      %p54 = scmp.ne.s32.totalorder %s46, %s49
      %p55 = scmp.eq.s32.totalorder %s13, 0
      %p56 = por %p54, %p55
      %p57 = scmp.ne.s32.totalorder %s46, %s49
      %p58 = scmp.eq.s32.totalorder %s18, 1
      %p59 = por %p57, %p58
      %p60 = scmp.ne.s32.totalorder %s49, %s50
      %p61 = scmp.eq.s32.totalorder %s18, 0
      %p62 = por %p60, %p61
      %p63 = scmp.ne.s32.totalorder %s49, %s50
      %p64 = scmp.eq.s32.totalorder %s19, 1
      %p65 = por %p63, %p64
      %p67 = scmp.ne.s32.totalorder %s50, %s66
      %p68 = scmp.eq.s32.totalorder %s19, 0
      %p69 = por %p67, %p68
      %s70 = ssub.s32 %s20, %s39
      %s71 = ssub.s32 %s21, %s35
      %s72 = sor.u32 %s70, %s71
      %s73 = ssub.s32 %s22, %s31
      %s74 = sor.u32 %s72, %s73
      %p75 = scmp.eq.s32.totalorder %s74, 0
      %s77 = sadd.s32 %s76, 1
      %s78 = scalar_select %p75, %s76, %s77
      %p81 = pneg %p75
      %p82 = scmp.eq.s32.totalorder %s13, 1
      %p83 = por %p81, %p82
      %p84 = scmp.ne.s32.totalorder %s76, %s79
      %p85 = scmp.eq.s32.totalorder %s13, 0
      %p86 = por %p84, %p85
      %p87 = scmp.ne.s32.totalorder %s76, %s79
      %p88 = scmp.eq.s32.totalorder %s18, 1
      %p89 = por %p87, %p88
      %p90 = scmp.ne.s32.totalorder %s79, %s80
      %p91 = scmp.eq.s32.totalorder %s18, 0
      %p92 = por %p90, %p91
      %p93 = scmp.ne.s32.totalorder %s79, %s80
      %p94 = scmp.eq.s32.totalorder %s19, 1
      %p95 = por %p93, %p94
      %p97 = scmp.ne.s32.totalorder %s80, %s96
      %p98 = scmp.eq.s32.totalorder %s19, 0
      %p99 = por %p97, %p98
      %p100 = scmp.le.s32.totalorder 1, %s13
      %p101 = scmp.lt.s32.totalorder %s13, 3
      %p102 = pnand %p100, %p101
      %p103 = pneg %p102
      // Predicated region
      $region9: #{tpu_custom_call.1} parent=5 // pred_check
        _
      $region10: #{tpu_custom_call.1} parent=5 // pred_check_branch
        %105 = sbr.rel (%p102) target = $region12
      $region11: #{tpu_custom_call.1} parent=5 // pred_region
        %s106 = ssub.s32 %s13, 1
      $region12: #{tpu_custom_call.1} parent=5 // pred_fallthru
        _
      %p107 = scmp.lt.s32.totalorder %s13, 2
      // Predicated region
      $region13: #{tpu_custom_call.1} parent=5 // pred_check
        %p108 = pneg %p107
      $region14: #{tpu_custom_call.1} parent=5 // pred_check_branch
        %110 = sbr.rel (%p108) target = $region16
      $region15: #{tpu_custom_call.1} parent=5 // pred_region
        // Predicated region
        $region17: #{tpu_custom_call.1} parent=15 // pred_check
          %p111 = pneg %p56
        $region18: #{tpu_custom_call.1} parent=15 // pred_check_branch
          %113 = sbr.rel (%p111) target = $region20
        $region19: #{tpu_custom_call.1} parent=15 // pred_region
          %s114 = sand.u32 %s46, 1
          %s115 = scalar_lea.sflag [#allocation3], %s114
          %s116 = sand.u32 %s46, 1
          %s117 = smul.addr %s116, 256
          %s118 = scalar_lea.vmem [#allocation2], %s117
          %s119 = smul.u32 16, %s22
          %s120 = smul.u32 2, %s21
          %122 = vsyncadd %s115, 0
          %s123 = smul.addr %s119, 2
          %s124 = sadd.s32 %s120, %s123
          %s125 = smul.addr %s20, 32
          %s126 = sadd.s32 %s124, %s125
          %s127 = smul.addr %s126, 8
          %s128 = scalar_lea.hbm %s0, %s127
          %s129 = sshll.u32 %s128, 4
          %s130 = int_to_ptr.hbm [resolvable:$true] %s129
          %s131 = sshll.u32 %s118, 4
          %s132 = int_to_ptr.vmem [resolvable:$true] %s131
          %137 = dma.hbm_to_vmem [thread:$0]  %s130, 4096, %s132, %s115, 256, 256, 16
        $region20: #{tpu_custom_call.1} parent=15 // pred_fallthru
          _
      $region16: #{tpu_custom_call.1} parent=5 // pred_fallthru
        _
      %p138 = scmp.le.s32.totalorder 1, %s13
      %p139 = scmp.lt.s32.totalorder %s13, 3
      %p140 = pnand %p138, %p139
      %p141 = pneg %p140
      // Predicated region
      $region21: #{tpu_custom_call.1} parent=5 // pred_check
        _
      $region22: #{tpu_custom_call.1} parent=5 // pred_check_branch
        %143 = sbr.rel (%p140) target = $region24
      $region23: #{tpu_custom_call.1} parent=5 // pred_region
        %s144 = ssub.s32 %s13, 1
        %s145 = sand.u32 %s49, 1
        %s146 = scalar_lea.sflag [#allocation3], %s145
        %s147 = sand.u32 %s49, 1
        %s148 = smul.addr %s147, 256
        %s149 = scalar_lea.vmem [#allocation2], %s148
        // Predicated region
        $region25: #{tpu_custom_call.1} parent=23 // pred_check
          %p150 = pneg %p62
        $region26: #{tpu_custom_call.1} parent=23 // pred_check_branch
          %152 = sbr.rel (%p150) target = $region28
        $region27: #{tpu_custom_call.1} parent=23 // pred_region
          %154 = dma.done %s146, 4096
        $region28: #{tpu_custom_call.1} parent=23 // pred_fallthru
          _
        %s155 = sand.u32 %s49, 1
        %s156 = scalar_lea.sflag [#allocation3], %s155
        %s157 = sand.u32 %s49, 1
        %s158 = smul.addr %s157, 256
        %s159 = scalar_lea.vmem [#allocation2], %s158
        %p160 = pneg %p62
        %p161 = pneg %p59
        %p162 = pneg %p92
        %p163 = pneg %p89
        %s164 = sand.u32 %s79, 1
        %s165 = scalar_lea.sflag [#allocation4], %s164
        %s166 = sand.u32 %s79, 1
        %s167 = smul.addr %s166, 256
        %s168 = scalar_lea.vmem [#allocation5], %s167
        %s169 = smul.u32 16, %s25
        %s170 = smul.u32 2, %s24
        %s171 = smul.u32 32, %s24
        %v172 = vld [vmem:[%s149] sm:$0xff]
        %v173 = vld [vmem:[%s149 + $0x8] sm:$0xff]
        %v174 = vld [vmem:[%s149 + $0x10] sm:$0xff]
        %v175 = vld [vmem:[%s149 + $0x18] sm:$0xff]
        %v176 = vld [vmem:[%s149 + $0x20] sm:$0xff]
        %v177 = vld [vmem:[%s149 + $0x28] sm:$0xff]
        %v178 = vld [vmem:[%s149 + $0x30] sm:$0xff]
        %v179 = vld [vmem:[%s149 + $0x38] sm:$0xff]
        %v180 = vld [vmem:[%s149 + $0x40] sm:$0xff]
        %v181 = vld [vmem:[%s149 + $0x48] sm:$0xff]
        %v182 = vld [vmem:[%s149 + $0x50] sm:$0xff]
        %v183 = vld [vmem:[%s149 + $0x58] sm:$0xff]
        %v184 = vld [vmem:[%s149 + $0x60] sm:$0xff]
        %v185 = vld [vmem:[%s149 + $0x68] sm:$0xff]
        %v186 = vld [vmem:[%s149 + $0x70] sm:$0xff]
        %v187 = vld [vmem:[%s149 + $0x78] sm:$0xff]
        %v188 = vld [vmem:[%s149 + $0x80] sm:$0xff]
        %v189 = vld [vmem:[%s149 + $0x88] sm:$0xff]
        %v190 = vld [vmem:[%s149 + $0x90] sm:$0xff]
        %v191 = vld [vmem:[%s149 + $0x98] sm:$0xff]
        %v192 = vld [vmem:[%s149 + $0xa0] sm:$0xff]
        %v193 = vld [vmem:[%s149 + $0xa8] sm:$0xff]
        %v194 = vld [vmem:[%s149 + $0xb0] sm:$0xff]
        %v195 = vld [vmem:[%s149 + $0xb8] sm:$0xff]
        %v196 = vld [vmem:[%s149 + $0xc0] sm:$0xff]
        %v197 = vld [vmem:[%s149 + $0xc8] sm:$0xff]
        %v198 = vld [vmem:[%s149 + $0xd0] sm:$0xff]
        %v199 = vld [vmem:[%s149 + $0xd8] sm:$0xff]
        %v200 = vld [vmem:[%s149 + $0xe0] sm:$0xff]
        %v201 = vld [vmem:[%s149 + $0xe8] sm:$0xff]
        %v202 = vld [vmem:[%s149 + $0xf0] sm:$0xff]
        %v203 = vld [vmem:[%s149 + $0xf8] sm:$0xff]
        %204 = vxpose.xlu0.b32.start [1/16] %v172, 128
        %205 = vxpose.xlu0.b32.cont [2/16] %v174, 128
        %206 = vxpose.xlu0.b32.cont [3/16] %v176, 128
        %207 = vxpose.xlu0.b32.cont [4/16] %v178, 128
        %208 = vxpose.xlu0.b32.cont [5/16] %v180, 128
        %209 = vxpose.xlu0.b32.cont [6/16] %v182, 128
        %210 = vxpose.xlu0.b32.cont [7/16] %v184, 128
        %211 = vxpose.xlu0.b32.cont [8/16] %v186, 128
        %212 = vxpose.xlu0.b32.cont [9/16] %v188, 128
        %213 = vxpose.xlu0.b32.cont [10/16] %v190, 128
        %214 = vxpose.xlu0.b32.cont [11/16] %v192, 128
        %215 = vxpose.xlu0.b32.cont [12/16] %v194, 128
        %216 = vxpose.xlu0.b32.cont [13/16] %v196, 128
        %217 = vxpose.xlu0.b32.cont [14/16] %v198, 128
        %218 = vxpose.xlu0.b32.cont [15/16] %v200, 128
        %219 = vxpose.xlu0.b32.end [16/16] %v202, 128
        %v220 = vpop.trf.xlu0
        %v221 = vpop.trf.xlu0
        %v222 = vpop.trf.xlu0
        %v223 = vpop.trf.xlu0
        %v224 = vpop.trf.xlu0
        %v225 = vpop.trf.xlu0
        %v226 = vpop.trf.xlu0
        %v227 = vpop.trf.xlu0
        %v228 = vpop.trf.xlu0
        %v229 = vpop.trf.xlu0
        %v230 = vpop.trf.xlu0
        %v231 = vpop.trf.xlu0
        %v232 = vpop.trf.xlu0
        %v233 = vpop.trf.xlu0
        %v234 = vpop.trf.xlu0
        %v235 = vpop.trf.xlu0
        %236 = vxpose.xlu0.b32.start [1/16] %v173, 128
        %237 = vxpose.xlu0.b32.cont [2/16] %v175, 128
        %238 = vxpose.xlu0.b32.cont [3/16] %v177, 128
        %239 = vxpose.xlu0.b32.cont [4/16] %v179, 128
        %240 = vxpose.xlu0.b32.cont [5/16] %v181, 128
        %241 = vxpose.xlu0.b32.cont [6/16] %v183, 128
        %242 = vxpose.xlu0.b32.cont [7/16] %v185, 128
        %243 = vxpose.xlu0.b32.cont [8/16] %v187, 128
        %244 = vxpose.xlu0.b32.cont [9/16] %v189, 128
        %245 = vxpose.xlu0.b32.cont [10/16] %v191, 128
        %246 = vxpose.xlu0.b32.cont [11/16] %v193, 128
        %247 = vxpose.xlu0.b32.cont [12/16] %v195, 128
        %248 = vxpose.xlu0.b32.cont [13/16] %v197, 128
        %249 = vxpose.xlu0.b32.cont [14/16] %v199, 128
        %250 = vxpose.xlu0.b32.cont [15/16] %v201, 128
        %251 = vxpose.xlu0.b32.end [16/16] %v203, 128
        %v252 = vpop.trf.xlu0
        %v253 = vpop.trf.xlu0
        %v254 = vpop.trf.xlu0
        %v255 = vpop.trf.xlu0
        %v256 = vpop.trf.xlu0
        %v257 = vpop.trf.xlu0
        %v258 = vpop.trf.xlu0
        %v259 = vpop.trf.xlu0
        %v260 = vpop.trf.xlu0
        %v261 = vpop.trf.xlu0
        %v262 = vpop.trf.xlu0
        %v263 = vpop.trf.xlu0
        %v264 = vpop.trf.xlu0
        %v265 = vpop.trf.xlu0
        %v266 = vpop.trf.xlu0
        %v267 = vpop.trf.xlu0
        %268 = vst [vmem:[%s168] sm:$0xff] %v220
        %269 = vst [vmem:[%s168 + $0x8] sm:$0xff] %v221
        %270 = vst [vmem:[%s168 + $0x10] sm:$0xff] %v222
        %271 = vst [vmem:[%s168 + $0x18] sm:$0xff] %v223
        %272 = vst [vmem:[%s168 + $0x20] sm:$0xff] %v224
        %273 = vst [vmem:[%s168 + $0x28] sm:$0xff] %v225
        %274 = vst [vmem:[%s168 + $0x30] sm:$0xff] %v226
        %275 = vst [vmem:[%s168 + $0x38] sm:$0xff] %v227
        %276 = vst [vmem:[%s168 + $0x40] sm:$0xff] %v228
        %277 = vst [vmem:[%s168 + $0x48] sm:$0xff] %v229
        %278 = vst [vmem:[%s168 + $0x50] sm:$0xff] %v230
        %279 = vst [vmem:[%s168 + $0x58] sm:$0xff] %v231
        %280 = vst [vmem:[%s168 + $0x60] sm:$0xff] %v232
        %281 = vst [vmem:[%s168 + $0x68] sm:$0xff] %v233
        %282 = vst [vmem:[%s168 + $0x70] sm:$0xff] %v234
        %283 = vst [vmem:[%s168 + $0x78] sm:$0xff] %v235
        %284 = vst [vmem:[%s168 + $0x80] sm:$0xff] %v252
        %285 = vst [vmem:[%s168 + $0x88] sm:$0xff] %v253
        %286 = vst [vmem:[%s168 + $0x90] sm:$0xff] %v254
        %287 = vst [vmem:[%s168 + $0x98] sm:$0xff] %v255
        %288 = vst [vmem:[%s168 + $0xa0] sm:$0xff] %v256
        %289 = vst [vmem:[%s168 + $0xa8] sm:$0xff] %v257
        %290 = vst [vmem:[%s168 + $0xb0] sm:$0xff] %v258
        %291 = vst [vmem:[%s168 + $0xb8] sm:$0xff] %v259
        %292 = vst [vmem:[%s168 + $0xc0] sm:$0xff] %v260
        %293 = vst [vmem:[%s168 + $0xc8] sm:$0xff] %v261
        %294 = vst [vmem:[%s168 + $0xd0] sm:$0xff] %v262
        %295 = vst [vmem:[%s168 + $0xd8] sm:$0xff] %v263
        %296 = vst [vmem:[%s168 + $0xe0] sm:$0xff] %v264
        %297 = vst [vmem:[%s168 + $0xe8] sm:$0xff] %v265
        %298 = vst [vmem:[%s168 + $0xf0] sm:$0xff] %v266
        %299 = vst [vmem:[%s168 + $0xf8] sm:$0xff] %v267
        %s300 = sand.u32 %s79, 1
        %s301 = scalar_lea.sflag [#allocation4], %s300
        %s302 = sand.u32 %s79, 1
        %s303 = smul.addr %s302, 256
        %s304 = scalar_lea.vmem [#allocation5], %s303
        // Predicated region
        $region29: #{tpu_custom_call.1} parent=23 // pred_check
          %p305 = pneg %p89
        $region30: #{tpu_custom_call.1} parent=23 // pred_check_branch
          %307 = sbr.rel (%p305) target = $region32
        $region31: #{tpu_custom_call.1} parent=23 // pred_region
          %s308 = smul.u32 32, %s24
          %310 = vsyncadd %s301, 0
          %s311 = sadd.s32 %s25, %s308
          %s312 = smul.addr %s23, 32
          %s313 = sadd.s32 %s311, %s312
          %s314 = smul.addr %s313, 8
          %s315 = scalar_lea.hbm %s1, %s314
          %s316 = sshll.u32 %s304, 4
          %s317 = int_to_ptr.vmem [resolvable:$true] %s316
          %s318 = sshll.u32 %s315, 4
          %s319 = int_to_ptr.hbm [resolvable:$true] %s318
          %324 = dma.vmem_to_hbm [thread:$0]  %s317, 4096, %s319, %s301, 128, 128, 8
        $region32: #{tpu_custom_call.1} parent=23 // pred_fallthru
          _
      $region24: #{tpu_custom_call.1} parent=5 // pred_fallthru
        _
      %p325 = scmp.le.s32.totalorder 2, %s13
      // Predicated region
      $region33: #{tpu_custom_call.1} parent=5 // pred_check
        %p326 = pneg %p325
      $region34: #{tpu_custom_call.1} parent=5 // pred_check_branch
        %328 = sbr.rel (%p326) target = $region36
      $region35: #{tpu_custom_call.1} parent=5 // pred_region
        %s329 = ssub.s32 %s13, 2
        // Predicated region
        $region37: #{tpu_custom_call.1} parent=35 // pred_check
          %p330 = pneg %p95
        $region38: #{tpu_custom_call.1} parent=35 // pred_check_branch
          %332 = sbr.rel (%p330) target = $region40
        $region39: #{tpu_custom_call.1} parent=35 // pred_region
          %s333 = sand.u32 %s80, 1
          %s334 = scalar_lea.sflag [#allocation4], %s333
          %s335 = sand.u32 %s80, 1
          %s336 = smul.addr %s335, 256
          %s337 = scalar_lea.vmem [#allocation5], %s336
          %339 = dma.done %s334, 4096
        $region40: #{tpu_custom_call.1} parent=35 // pred_fallthru
          _
      $region36: #{tpu_custom_call.1} parent=5 // pred_fallthru
        _
    $region6: #{tpu_custom_call.1} parent=1 // loop_footer
      %s17 = sadd.s32 1, %s13
    $region7: #{tpu_custom_call.1} parent=1 // loop_footer_branch
      %12 = sbr.rel target = $region3
    $region8: #{tpu_custom_call.1} parent=1 // loop_exit
      _
    %340 = vsyncpa [#allocation3], 1
    %s341 = scalar_lea.sflag [#allocation3], 1
    %342 = vsyncpa %s341, 1
    %343 = vsyncpa [#allocation4], 1
    %s344 = scalar_lea.sflag [#allocation4], 1
    %345 = vsyncpa %s344, 1

</llo_original>
